<compile_context>
chip_gen: v7x
topology: tpu7x:2x2x1
jax: 0.10.0
libtpu: 0.0.40
codegen_flags: <defaults>
</compile_context>

<pallas_src>
import jax
import jax.numpy as jnp
from jax.experimental import pallas as pl
from jax.experimental.pallas import tpu as pltpu


_LANE_CHOICES = (1024, 512, 256, 128)   # preferred lane-dense last dims


def _round_up(x: int, m: int) -> int:
    return ((x + m - 1) // m) * m


def _tpu_defaults():
    """(num_cores, max_tile_elements, vmem_limit_bytes) per TPU generation."""
    kind = ""
    try:
        kind = jax.devices()[0].device_kind.lower()
    except Exception:
        pass
    if "v7" in kind or "7x" in kind:
        # 2 TensorCores, 64 MiB physical VMEM per core: 4 MiB/input/buffer.
        return 2, 1 << 20, 40 << 20
    if "v6" in kind:
        # 1 TC, 128 MiB physical VMEM: raise above the 32 MiB scoped default.
        return 1, 1 << 20, 40 << 20
    if "v5" in kind:
        # 1 TC, raise above v5e's 16 MiB scoped default (physical is 128 MiB).
        return 1, 1 << 20, 40 << 20
    # Unknown generation: configuration proven safe under default scoped VMEM.
    return 1, 1 << 19, None


def mse_loss(inputs, targets):
    """Pallas TPU equivalent of torch.nn.MSELoss()(inputs.view(-1), targets.view(-1))."""
    x = jnp.ravel(inputs)
    y = jnp.ravel(targets)
    n = int(x.shape[0])
    assert y.shape[0] == n and n > 0

    num_cores, max_tile_elems, vmem_limit = _tpu_defaults()

    # Sublane packing requirement of the narrowest input dtype:
    # 8 for 4-byte, 16 for 2-byte (bf16), 32 for 1-byte (int8/fp8) types.
    min_item = min(x.dtype.itemsize, y.dtype.itemsize)
    pack = max(8, 32 // max(min_item, 1))

    # ---- choose a lane-dense 2-D view (rows, lanes) of the flat data -------
    lanes = next((l for l in _LANE_CHOICES if n % l == 0), None)
    if lanes is not None and n // lanes >= pack:
        # Zero-copy path: plain reshape; inputs are read from HBM exactly once.
        rows = n // lanes
        x2 = x.reshape(rows, lanes)
        y2 = y.reshape(rows, lanes)
    else:
        # Fallback (n % 128 != 0, or only a few KiB of data): minimal zero-pad.
        # Padded elements contribute (0 - 0)^2 = 0 to the sum; we divide by the
        # true n below.  TODO(synk): for huge n with n % 128 != 0 this still
        # materializes one padded copy of each operand.
        lanes = 1024 if n >= pack * 1024 else 128
        rows = _round_up(pl.cdiv(n, lanes), pack)
        pad = rows * lanes - n
        x2 = jnp.pad(x, (0, pad)).reshape(rows, lanes)
        y2 = jnp.pad(y, (0, pad)).reshape(rows, lanes)

    # ---- tiling -------------------------------------------------------------
    max_rows = max(pack, (max_tile_elems // lanes) // pack * pack)
    tile_rows = min(
        max_rows,                                      # VMEM / step-size cap
        _round_up(pl.cdiv(rows, num_cores), pack),     # even split over cores
        (rows // pack) * pack,                         # never exceed the array
    )
    steps_per_core = pl.cdiv(rows, num_cores * tile_rows)
    coverage = num_cores * steps_per_core * tile_rows
    needs_mask = coverage != rows                      # static (trace-time)
    last_block = pl.cdiv(rows, tile_rows) - 1          # clamp target
    inv_n = 1.0 / float(n)

    def in_map(c, i):
        # Clamp so a core's trailing fully-out-of-range blocks re-read the last
        # real block; their contribution is masked to zero inside the kernel.
        return (jnp.minimum(c * steps_per_core + i, last_block), 0)

    def kernel(x_ref, y_ref, out_ref, acc_ref):
        c = pl.program_id(0)
        step = pl.program_id(1)

        @pl.when(step == 0)
        def _init():
            acc_ref[...] = jnp.zeros_like(acc_ref)

        d = x_ref[...].astype(jnp.float32) - y_ref[...].astype(jnp.float32)
        sq = d * d

        if needs_mask:
            # Rows at/after `rows` are Pallas partial-block padding (garbage)
            # or belong to a clamped out-of-range block: zero them out.
            row_start = (c * steps_per_core + step) * tile_rows
            row_ids = jax.lax.broadcasted_iota(jnp.int32, (tile_rows, lanes), 0)
            sq = jnp.where(row_start + row_ids < rows, sq, 0.0)

        # vreg-aligned partial reduction: collapse groups of 8 sublanes with
        # plain VPU adds into an (8, lanes) accumulator.  The single
        # cross-sublane + cross-lane collapse happens once, in finalize.
        acc_ref[...] += sq.reshape(tile_rows // 8, 8, lanes).sum(axis=0)

        @pl.when(step == pl.num_programs(1) - 1)
        def _finalize():
            total = jnp.sum(acc_ref[...]) * inv_n       # fold 1/n in-kernel
            out_ref[...] = jnp.broadcast_to(total, out_ref.shape)

    out = pl.pallas_call(
        kernel,
        out_shape=jax.ShapeDtypeStruct((num_cores * 8, 128), jnp.float32),
        grid_spec=pltpu.PrefetchScalarGridSpec(
            num_scalar_prefetch=0,
            grid=(num_cores, steps_per_core),
            in_specs=[
                pl.BlockSpec((tile_rows, lanes), in_map),
                pl.BlockSpec((tile_rows, lanes), in_map),
            ],
            out_specs=pl.BlockSpec((8, 128), lambda c, i: (c, 0)),
            scratch_shapes=[pltpu.VMEM((8, lanes), jnp.float32)],
        ),
        compiler_params=pltpu.CompilerParams(
            dimension_semantics=("parallel", "arbitrary"),
            vmem_limit_bytes=vmem_limit,
        ),
    )(x2, y2)

    # Each core's (8,128) block is filled with (its partial sum) / n; summing
    # the per-core values yields the mean.
    result = jnp.sum(out[::8, 0])
    out_dtype = jnp.promote_types(inputs.dtype, targets.dtype)
    if jnp.issubdtype(out_dtype, jnp.floating):
        result = result.astype(out_dtype)
    return result


if __name__ == "__main__":
    key = jax.random.PRNGKey(0)
    loss_fn = jax.jit(mse_loss)

    # Case 1: n divisible by 1024 -> exercises the zero-copy (reshape-only) path.
    shape_a = (2, 4, 32, 32)          # n = 8192
    k1, k2, k3, k4 = jax.random.split(key, 4)
    xa = jax.random.uniform(k1, shape_a, dtype=jnp.float32)
    ya = jax.random.uniform(k2, shape_a, dtype=jnp.float32)
    loss_a = jax.block_until_ready(loss_fn(xa, ya))
    ref_a = jnp.mean((jnp.ravel(xa) - jnp.ravel(ya)) ** 2)
    assert jnp.allclose(loss_a, ref_a, rtol=1e-5, atol=1e-6), (loss_a, ref_a)

    # Case 2: tiny input -> exercises the minimal-pad fallback path.
    shape_b = (2, 1, 16, 16)          # n = 512
    xb = jax.random.uniform(k3, shape_b, dtype=jnp.float32)
    yb = jax.random.uniform(k4, shape_b, dtype=jnp.float32)
    loss_b = jax.block_until_ready(loss_fn(xb, yb))
    ref_b = jnp.mean((jnp.ravel(xb) - jnp.ravel(yb)) ** 2)
    assert jnp.allclose(loss_b, ref_b, rtol=1e-5, atol=1e-6), (loss_b, ref_b)

    print("KERNEL_OK")
</pallas_src>

<mosaic_0001>
module attributes {stable_mosaic.version = 11 : i64} {
  func.func @kernel(%arg0: i32, %arg1: i32, %arg2: memref<8x1024xf32, #tpu.memory_space<vmem>>, %arg3: memref<8x1024xf32, #tpu.memory_space<vmem>>, %arg4: memref<8x128xf32, #tpu.memory_space<vmem>>, %arg5: memref<8x1024xf32, #tpu.memory_space<vmem>>) attributes {dimension_semantics = [#tpu.dimension_semantics<parallel>, #tpu.dimension_semantics<arbitrary>], iteration_bounds = array<i64: 1, 1>, scalar_prefetch = 0 : i64, scratch_operands = 1 : i64, tpu.core_type = #tpu.core_type<tc>, window_params = [{transform_indices = @transform_0, window_bounds = array<i64: 8, 1024>}, {transform_indices = @transform_1, window_bounds = array<i64: 8, 1024>}, {transform_indices = @transform_2, window_bounds = array<i64: 8, 128>}]} {
    %c0_i32 = arith.constant 0 : i32
    %0 = arith.cmpi eq, %arg1, %c0_i32 : i32
    %1 = arith.extui %0 : i1 to i32
    %c0_i32_0 = arith.constant 0 : i32
    %2 = arith.cmpi ne, %1, %c0_i32_0 : i32
    scf.if %2 {
      %cst_10 = arith.constant 0.000000e+00 : f32
      %15 = vector.broadcast %cst_10 : f32 to vector<8x1024xf32>
      %c0_11 = arith.constant 0 : index
      %c0_12 = arith.constant 0 : index
      %16 = vector.load %arg5[%c0_11, %c0_12] : memref<8x1024xf32, #tpu.memory_space<vmem>>, vector<8x1024xf32>
      tpu.vector_store %arg5[%c0_11, %c0_12], %15 {strides = array<i32>} : memref<8x1024xf32, #tpu.memory_space<vmem>>, vector<8x1024xf32>,
    } else {
    }
    %c0 = arith.constant 0 : index
    %c0_1 = arith.constant 0 : index
    %3 = vector.load %arg2[%c0, %c0_1] : memref<8x1024xf32, #tpu.memory_space<vmem>>, vector<8x1024xf32>
    %c0_2 = arith.constant 0 : index
    %c0_3 = arith.constant 0 : index
    %4 = vector.load %arg3[%c0_2, %c0_3] : memref<8x1024xf32, #tpu.memory_space<vmem>>, vector<8x1024xf32>
    %5 = arith.subf %3, %4 : vector<8x1024xf32>
    %6 = arith.mulf %5, %5 : vector<8x1024xf32>
    %c0_4 = arith.constant 0 : index
    %c0_5 = arith.constant 0 : index
    %7 = vector.load %arg5[%c0_4, %c0_5] : memref<8x1024xf32, #tpu.memory_space<vmem>>, vector<8x1024xf32>
    %8 = vector.shape_cast %6 : vector<8x1024xf32> to vector<1x8x1024xf32>
    %cst = arith.constant dense<0.000000e+00> : vector<8x1024xf32>
    %9 = vector.multi_reduction <add>, %8, %cst [0] : vector<1x8x1024xf32> to vector<8x1024xf32>
    %10 = arith.addf %7, %9 : vector<8x1024xf32>
    %c0_6 = arith.constant 0 : index
    %c0_7 = arith.constant 0 : index
    %11 = vector.load %arg5[%c0_6, %c0_7] : memref<8x1024xf32, #tpu.memory_space<vmem>>, vector<8x1024xf32>
    tpu.vector_store %arg5[%c0_6, %c0_7], %10 {strides = array<i32>} : memref<8x1024xf32, #tpu.memory_space<vmem>>, vector<8x1024xf32>,
    %c0_i32_8 = arith.constant 0 : i32
    %12 = arith.cmpi eq, %arg1, %c0_i32_8 : i32
    %13 = arith.extui %12 : i1 to i32
    %c0_i32_9 = arith.constant 0 : i32
    %14 = arith.cmpi ne, %13, %c0_i32_9 : i32
    scf.if %14 {
      %c0_10 = arith.constant 0 : index
      %c0_11 = arith.constant 0 : index
      %15 = vector.load %arg5[%c0_10, %c0_11] : memref<8x1024xf32, #tpu.memory_space<vmem>>, vector<8x1024xf32>
      %16 = vector.shape_cast %15 : vector<8x1024xf32> to vector<1x8x1024xf32>
      %cst_12 = arith.constant dense<0.000000e+00> : vector<1xf32>
      %17 = vector.multi_reduction <add>, %16, %cst_12 [1, 2] : vector<1x8x1024xf32> to vector<1xf32>
      %18 = vector.shape_cast %17 : vector<1xf32> to vector<1x1x1xf32>
      %19 = vector.extract %18[0, 0, 0] : f32 from vector<1x1x1xf32>
      %cst_13 = arith.constant 1.22070313E-4 : f32
      %20 = arith.mulf %19, %cst_13 : f32
      %21 = vector.broadcast %20 : f32 to vector<8x128xf32>
      %c0_14 = arith.constant 0 : index
      %c0_15 = arith.constant 0 : index
      %22 = vector.load %arg4[%c0_14, %c0_15] : memref<8x128xf32, #tpu.memory_space<vmem>>, vector<8x128xf32>
      tpu.vector_store %arg4[%c0_14, %c0_15], %21 {strides = array<i32>} : memref<8x128xf32, #tpu.memory_space<vmem>>, vector<8x128xf32>,
    } else {
    }
    return
  }
  func.func @transform_0(%arg0: i32, %arg1: i32) -> (i32, i32) {
    %c1_i32 = arith.constant 1 : i32
    %0 = arith.muli %arg0, %c1_i32 : i32
    %1 = arith.addi %0, %arg1 : i32
    %c0_i32 = arith.constant 0 : i32
    %2 = arith.minsi %1, %c0_i32 : i32
    %c0_i32_0 = arith.constant 0 : i32
    %c0_i32_1 = arith.constant 0 : i32
    return %2, %c0_i32_0 : i32, i32
  }
  func.func @transform_1(%arg0: i32, %arg1: i32) -> (i32, i32) {
    %c1_i32 = arith.constant 1 : i32
    %0 = arith.muli %arg0, %c1_i32 : i32
    %1 = arith.addi %0, %arg1 : i32
    %c0_i32 = arith.constant 0 : i32
    %2 = arith.minsi %1, %c0_i32 : i32
    %c0_i32_0 = arith.constant 0 : i32
    %c0_i32_1 = arith.constant 0 : i32
    return %2, %c0_i32_0 : i32, i32
  }
  func.func @transform_2(%arg0: i32, %arg1: i32) -> (i32, i32) {
    %c0_i32 = arith.constant 0 : i32
    %c0_i32_0 = arith.constant 0 : i32
    return %arg0, %c0_i32 : i32, i32
  }
}

</mosaic_0001>

<llo_original>
// kernel: mse_loss.1
$region0: #{mse_loss.1}
  #allocation0 [shape = 'u32[]', space=smem, size = 0x4, offset = 0x4, fixed_abs, tag = 'smem constant byte address 0x4 - core index']
  #allocation1 [shape = 'u32[144,128]{1,0:T(1,128)}', space=vmem, size = 0x12000, scoped, tag = 'internal scratch']
  #allocation2 [shape = 'f32[8,1024]{1,0:T(8,128)}', space=vmem, size = 0x8000, scoped, tag = 'scratch operand']
  %s0 = inlined_call_operand.vmem [shape: f32[8,1024], index: 0, kind: input, shape index: {}]
  %s1 = inlined_call_operand.vmem [shape: f32[8,1024], index: 1, kind: input, shape index: {}]
  %s2 = inlined_call_operand.vmem [shape: f32[8,128], index: 2, kind: output, shape index: {}]
  %s3 = sld [smem:[#allocation0]]
  $region26: #{mse_loss.1} parent=0
    _
  %s5 = ssub.s32 1, %s3
  %s6 = scalar_select 0, %s5, %s3
  // Predicated region
  $region2: #{mse_loss.1} parent=0 // pred_check
    _
  $region3: #{mse_loss.1} parent=0 // pred_check_branch
    %8 = sbr.rel (0) target = $region5
  $region4: #{mse_loss.1} parent=0 // pred_region
    %s9 = sadd.s32 0, 0
    %p10 = scmp.lt.s32.totalorder %s9, 0
    %s11 = scalar_select %p10, %s9, 0
    %p12 = scmp.lt.s32.totalorder %s11, 0
    %s13 = scalar_select %p12, %s11, 0
    %s14 = smul.addr %s13, 8
    %s15 = smul.addr %s14, 8
    %s16 = scalar_lea.vmem %s0, %s15
    %s17 = sadd.s32 0, 0
    %p18 = scmp.lt.s32.totalorder %s17, 0
    %s19 = scalar_select %p18, %s17, 0
  $region5: #{mse_loss.1} parent=0 // pred_fallthru
    _
  // Predicated region
  $region6: #{mse_loss.1} parent=0 // pred_check
    _
  $region7: #{mse_loss.1} parent=0 // pred_check_branch
    %21 = sbr.rel (0) target = $region9
  $region8: #{mse_loss.1} parent=0 // pred_region
    %s22 = sadd.s32 0, 0
    %p23 = scmp.lt.s32.totalorder %s22, 0
    %s24 = scalar_select %p23, %s22, 0
    %p25 = scmp.lt.s32.totalorder %s24, 0
    %s26 = scalar_select %p25, %s24, 0
    %s27 = smul.addr %s26, 8
    %s28 = smul.addr %s27, 8
    %s29 = scalar_lea.vmem %s1, %s28
    %s30 = sadd.s32 0, 0
    %p31 = scmp.lt.s32.totalorder %s30, 0
    %s32 = scalar_select %p31, %s30, 0
  $region9: #{mse_loss.1} parent=0 // pred_fallthru
    _
  %s33 = sadd.s32 0, 0
  %p34 = scmp.lt.s32.totalorder %s33, 0
  %s35 = scalar_select %p34, %s33, 0
  %p36 = scmp.lt.s32.totalorder %s35, 0
  %s37 = scalar_select %p36, %s35, 0
  %s38 = smul.addr %s37, 8
  %s39 = smul.addr %s38, 8
  %s40 = scalar_lea.vmem %s0, %s39
  %s41 = sadd.s32 0, 0
  %p42 = scmp.lt.s32.totalorder %s41, 0
  %s43 = scalar_select %p42, %s41, 0
  %p44 = scmp.lt.s32.totalorder %s43, 0
  %s45 = scalar_select %p44, %s43, 0
  %s46 = smul.addr %s45, 8
  %s47 = smul.addr %s46, 8
  %s48 = scalar_lea.vmem %s1, %s47
  %s49 = sadd.s32 0, 0
  %p50 = scmp.lt.s32.totalorder %s49, 0
  %s51 = scalar_select %p50, %s49, 0
  %p52 = scmp.lt.s32.totalorder %s51, 0
  %s53 = scalar_select %p52, %s51, 0
  %s54 = smul.addr %s53, 8
  %s55 = smul.addr %s54, 8
  %s56 = scalar_lea.vmem %s0, %s55
  %s57 = sadd.s32 0, 0
  %p58 = scmp.lt.s32.totalorder %s57, 0
  %s59 = scalar_select %p58, %s57, 0
  %s60 = sadd.s32 0, 0
  %p61 = scmp.lt.s32.totalorder %s60, 0
  %s62 = scalar_select %p61, %s60, 0
  %p63 = scmp.lt.s32.totalorder %s62, 0
  %s64 = scalar_select %p63, %s62, 0
  %s65 = smul.addr %s64, 8
  %s66 = smul.addr %s65, 8
  %s67 = scalar_lea.vmem %s1, %s66
  %s68 = sadd.s32 0, 0
  %p69 = scmp.lt.s32.totalorder %s68, 0
  %s70 = scalar_select %p69, %s68, 0
  %p71 = scmp.eq.s32.totalorder 0, 0
  // Predicated region
  $region10: #{mse_loss.1} parent=0 // pred_check
    %p72 = pneg %p71
  $region11: #{mse_loss.1} parent=0 // pred_check_branch
    %74 = sbr.rel (%p72) target = $region13
  $region12: #{mse_loss.1} parent=0 // pred_region
    %75 = vst [vmem:[#allocation2] sm:$0xff] 0.0
    %76 = vst [vmem:[#allocation2 + $0x8] sm:$0xff] 0.0
    %77 = vst [vmem:[#allocation2 + $0x10] sm:$0xff] 0.0
    %78 = vst [vmem:[#allocation2 + $0x18] sm:$0xff] 0.0
    %79 = vst [vmem:[#allocation2 + $0x20] sm:$0xff] 0.0
    %80 = vst [vmem:[#allocation2 + $0x28] sm:$0xff] 0.0
    %81 = vst [vmem:[#allocation2 + $0x30] sm:$0xff] 0.0
    %82 = vst [vmem:[#allocation2 + $0x38] sm:$0xff] 0.0
  $region13: #{mse_loss.1} parent=0 // pred_fallthru
    _
  %v83 = vld [vmem:[%s56] sm:$0xff]
  %v84 = vld [vmem:[%s56 + $0x8] sm:$0xff]
  %v85 = vld [vmem:[%s56 + $0x10] sm:$0xff]
  %v86 = vld [vmem:[%s56 + $0x18] sm:$0xff]
  %v87 = vld [vmem:[%s56 + $0x20] sm:$0xff]
  %v88 = vld [vmem:[%s56 + $0x28] sm:$0xff]
  %v89 = vld [vmem:[%s56 + $0x30] sm:$0xff]
  %v90 = vld [vmem:[%s56 + $0x38] sm:$0xff]
  %v91 = vld [vmem:[%s67] sm:$0xff]
  %v92 = vld [vmem:[%s67 + $0x8] sm:$0xff]
  %v93 = vld [vmem:[%s67 + $0x10] sm:$0xff]
  %v94 = vld [vmem:[%s67 + $0x18] sm:$0xff]
  %v95 = vld [vmem:[%s67 + $0x20] sm:$0xff]
  %v96 = vld [vmem:[%s67 + $0x28] sm:$0xff]
  %v97 = vld [vmem:[%s67 + $0x30] sm:$0xff]
  %v98 = vld [vmem:[%s67 + $0x38] sm:$0xff]
  %v99 = vsub.f32 %v83, %v91
  %v100 = vsub.f32 %v84, %v92
  %v101 = vsub.f32 %v85, %v93
  %v102 = vsub.f32 %v86, %v94
  %v103 = vsub.f32 %v87, %v95
  %v104 = vsub.f32 %v88, %v96
  %v105 = vsub.f32 %v89, %v97
  %v106 = vsub.f32 %v90, %v98
  %v107 = vmul.f32 %v99, %v99
  %v108 = vmul.f32 %v100, %v100
  %v109 = vmul.f32 %v101, %v101
  %v110 = vmul.f32 %v102, %v102
  %v111 = vmul.f32 %v103, %v103
  %v112 = vmul.f32 %v104, %v104
  %v113 = vmul.f32 %v105, %v105
  %v114 = vmul.f32 %v106, %v106
  %v115 = vld [vmem:[#allocation2] sm:$0xff]
  %v116 = vld [vmem:[#allocation2 + $0x8] sm:$0xff]
  %v117 = vld [vmem:[#allocation2 + $0x10] sm:$0xff]
  %v118 = vld [vmem:[#allocation2 + $0x18] sm:$0xff]
  %v119 = vld [vmem:[#allocation2 + $0x20] sm:$0xff]
  %v120 = vld [vmem:[#allocation2 + $0x28] sm:$0xff]
  %v121 = vld [vmem:[#allocation2 + $0x30] sm:$0xff]
  %v122 = vld [vmem:[#allocation2 + $0x38] sm:$0xff]
  %v123 = vadd.f32 %v107, 0.0
  %v124 = vadd.f32 %v108, 0.0
  %v125 = vadd.f32 %v109, 0.0
  %v126 = vadd.f32 %v110, 0.0
  %v127 = vadd.f32 %v111, 0.0
  %v128 = vadd.f32 %v112, 0.0
  %v129 = vadd.f32 %v113, 0.0
  %v130 = vadd.f32 %v114, 0.0
  %v131 = vadd.f32 %v115, %v123
  %v132 = vadd.f32 %v116, %v124
  %v133 = vadd.f32 %v117, %v125
  %v134 = vadd.f32 %v118, %v126
  %v135 = vadd.f32 %v119, %v127
  %v136 = vadd.f32 %v120, %v128
  %v137 = vadd.f32 %v121, %v129
  %v138 = vadd.f32 %v122, %v130
  %139 = vst [vmem:[#allocation2] sm:$0xff] %v131
  %140 = vst [vmem:[#allocation2 + $0x8] sm:$0xff] %v132
  %141 = vst [vmem:[#allocation2 + $0x10] sm:$0xff] %v133
  %142 = vst [vmem:[#allocation2 + $0x18] sm:$0xff] %v134
  %143 = vst [vmem:[#allocation2 + $0x20] sm:$0xff] %v135
  %144 = vst [vmem:[#allocation2 + $0x28] sm:$0xff] %v136
  %145 = vst [vmem:[#allocation2 + $0x30] sm:$0xff] %v137
  %146 = vst [vmem:[#allocation2 + $0x38] sm:$0xff] %v138
  // Predicated region
  $region14: #{mse_loss.1} parent=0 // pred_check
    %p147 = pneg %p71
  $region15: #{mse_loss.1} parent=0 // pred_check_branch
    %149 = sbr.rel (%p147) target = $region17
  $region16: #{mse_loss.1} parent=0 // pred_region
    %v150 = vld [vmem:[#allocation2] sm:$0xff]
    %v151 = vld [vmem:[#allocation2 + $0x8] sm:$0xff]
    %v152 = vld [vmem:[#allocation2 + $0x10] sm:$0xff]
    %v153 = vld [vmem:[#allocation2 + $0x18] sm:$0xff]
    %v154 = vld [vmem:[#allocation2 + $0x20] sm:$0xff]
    %v155 = vld [vmem:[#allocation2 + $0x28] sm:$0xff]
    %v156 = vld [vmem:[#allocation2 + $0x30] sm:$0xff]
    %v157 = vld [vmem:[#allocation2 + $0x38] sm:$0xff]
    %v158 = vadd.f32 %v150, %v151
    %v159 = vadd.f32 %v158, %v152
    %v160 = vadd.f32 %v159, %v153
    %v161 = vadd.f32 %v160, %v154
    %v162 = vadd.f32 %v161, %v155
    %v163 = vadd.f32 %v162, %v156
    %v164 = vadd.f32 %v163, %v157
    %165 = vadd.xlane.f32.xlu0 %v164
    %v166 = vpop.xlane.xlu0 %165
    %v167 = vrot.slane %v166, 4
    %v168 = vadd.f32 %v166, %v167
    %v169 = vrot.slane %v168, 2
    %v170 = vadd.f32 %v168, %v169
    %v171 = vrot.slane %v170, 1
    %v172 = vadd.f32 %v170, %v171
    %s173 = vtos %v172
    %s174 = smul.f32 %s173, 0.00012207031
    %v175 = vstv %s174
    %176 = vst [vmem:[%s2] sm:$0xff] %v175
  $region17: #{mse_loss.1} parent=0 // pred_fallthru
    _
  // Predicated region
  $region18: #{mse_loss.1} parent=0 // pred_check
    _
  $region19: #{mse_loss.1} parent=0 // pred_check_branch
    %178 = sbr.rel (0) target = $region21
  $region20: #{mse_loss.1} parent=0 // pred_region
    _
  $region21: #{mse_loss.1} parent=0 // pred_fallthru
    _
  // Predicated region
  $region22: #{mse_loss.1} parent=0 // pred_check
    _
  $region23: #{mse_loss.1} parent=0 // pred_check_branch
    %180 = sbr.rel (0) target = $region25
  $region24: #{mse_loss.1} parent=0 // pred_region
    _
  $region25: #{mse_loss.1} parent=0 // pred_fallthru
    _

</llo_original>
